<compile_context>
chip_gen: v7x
topology: tpu7x:2x2x1
jax: 0.10.0
libtpu: 0.0.40
codegen_flags: <defaults>
</compile_context>

<pallas_src>
import functools

import jax
import jax.numpy as jnp
from jax import lax
from jax.experimental import pallas as pl
from jax.experimental.pallas import tpu as pltpu


def _ls_ce_kernel(logits_ref, labels_ref, loss_ref, *,
                  label_smoothing: float, true_n: int, tile_n: int):
    # logits_ref: (TILE_N, C) tile in native dtype; labels_ref: (TILE_N, 1) int32;
    # loss_ref:   (TILE_N, 1) f32 per-row loss (padded rows written as 0).
    i = pl.program_id(0)

    x = logits_ref[...].astype(jnp.float32)          # single upcast after the DMA
    tn, c = x.shape

    # Stable log-softmax pieces (logprobs never materialized).
    row_max = jnp.max(x, axis=-1, keepdims=True)
    shifted = x - row_max                            # (tn, C)
    lse = jnp.log(jnp.sum(jnp.exp(shifted), axis=-1, keepdims=True))   # (tn, 1)

    # Gather shifted[label] via select + row-sum (no dynamic gather / no one-hot cast).
    labels = labels_ref[...]                         # (tn, 1) int32
    col_ids = lax.broadcasted_iota(jnp.int32, (tn, c), 1)
    gathered = jnp.sum(jnp.where(col_ids == labels, shifted, 0.0),
                       axis=-1, keepdims=True)       # (tn, 1) = shifted at label
    row_sum = jnp.sum(shifted, axis=-1, keepdims=True)

    # nll    = -(shifted[label] - lse) = lse - gathered
    # smooth = -mean(shifted - lse)    = lse - row_sum / C
    confidence = 1.0 - label_smoothing
    loss = (confidence * (lse - gathered)
            + label_smoothing * (lse - row_sum * (1.0 / c)))           # (tn, 1)

    # Mask rows past the true batch size (last tile may be padded).
    row_ids = i * tile_n + lax.broadcasted_iota(jnp.int32, (tn, 1), 0)
    loss_ref[...] = jnp.where(row_ids < true_n, loss, 0.0)


def _choose_tile_n(n: int, c: int, dtype_bytes: int) -> int:
    # Keep the double-buffered logits input under ~8 MiB so the whole pipeline fits
    # comfortably inside a 32 MiB scoped-VMEM limit on every TPU generation.
    budget = 8 * 1024 * 1024
    tile = min(n, 512)
    tile = max(8, (tile // 8) * 8)                   # multiple of 8 sublanes
    while tile > 8 and 2 * tile * c * dtype_bytes > budget:
        tile = max(8, ((tile // 2) // 8) * 8)
    return tile


def negls_cross_entropy_loss(logits: jax.Array, labels: jax.Array,
                             label_smoothing: float = 0.0) -> jax.Array:
    """Forward pass of NegLS_CrossEntropyLoss. logits: [N, C] float, labels: [N] int."""
    n, c = logits.shape
    dtype_bytes = jnp.dtype(logits.dtype).itemsize

    tile_n = _choose_tile_n(n, c, dtype_bytes)
    num_tiles = pl.cdiv(n, tile_n)
    n_padded = num_tiles * tile_n

    labels2d = labels.reshape(n, 1).astype(jnp.int32)
    if n_padded != n:
        logits = jnp.pad(logits, ((0, n_padded - n), (0, 0)))
        labels2d = jnp.pad(labels2d, ((0, n_padded - n), (0, 0)))

    kernel = functools.partial(
        _ls_ce_kernel,
        label_smoothing=float(label_smoothing),
        true_n=n,
        tile_n=tile_n,
    )

    row_losses = pl.pallas_call(
        kernel,
        out_shape=jax.ShapeDtypeStruct((n_padded, 1), jnp.float32),
        grid=(num_tiles,),
        in_specs=[
            pl.BlockSpec((tile_n, c), lambda i: (i, 0)),   # logits tile (native dtype)
            pl.BlockSpec((tile_n, 1), lambda i: (i, 0)),   # labels column
        ],
        out_specs=pl.BlockSpec((tile_n, 1), lambda i: (i, 0)),
        compiler_params=pltpu.CompilerParams(
            dimension_semantics=("parallel",),             # megacore shard on v7x
            vmem_limit_bytes=32 * 1024 * 1024,
        ),
        cost_estimate=pl.CostEstimate(
            flops=6 * n * c,
            transcendentals=n * c,
            bytes_accessed=n * c * dtype_bytes + n * 4 + n_padded * 4,
        ),
    )(logits, labels2d)

    # Sum of per-row losses (padded rows already zeroed), divided by the true N.
    return jnp.sum(row_losses) * (1.0 / n)


def _reference(logits, labels, label_smoothing):
    # Pure-JAX reference of the torch module's forward.
    confidence = 1.0 - label_smoothing
    logprobs = jax.nn.log_softmax(logits.astype(jnp.float32), axis=-1)
    nll = -jnp.take_along_axis(logprobs, labels[:, None], axis=-1)[:, 0]
    smooth = -jnp.mean(logprobs, axis=-1)
    loss = confidence * nll + label_smoothing * smooth
    return jnp.sum(loss) / loss.shape[0]


if __name__ == "__main__":
    key = jax.random.PRNGKey(0)

    test_cases = [
        # (N, C, label_smoothing, dtype)
        (8, 32, 0.1, jnp.float32),      # small, exactly one tile
        (20, 128, 0.1, jnp.float32),    # N not a multiple of the tile -> padding path
        (16, 64, 0.0, jnp.float32),     # no smoothing (pure NLL of log_softmax)
        (8, 32, 0.1, jnp.bfloat16),     # native bf16 input, upcast inside kernel
    ]

    out = None
    for idx, (N, C, ls, dt) in enumerate(test_cases):
        k_logits, k_labels, key = jax.random.split(key, 3)
        logits = jax.random.normal(k_logits, (N, C), dtype=jnp.float32).astype(dt)
        labels = jax.random.randint(k_labels, (N,), 0, C, dtype=jnp.int32)

        out = negls_cross_entropy_loss(logits, labels, ls)
        out = jax.block_until_ready(out)

        ref = _reference(logits, labels, ls)
        assert jnp.allclose(out, ref, atol=1e-5, rtol=1e-5), (idx, out, ref)

    print("KERNEL_OK")
</pallas_src>

<mosaic_0001>
module attributes {stable_mosaic.version = 11 : i64} {
  func.func @_ls_ce_kernel(%arg0: i32, %arg1: memref<8x32xf32, #tpu.memory_space<vmem>>, %arg2: memref<8x1xi32, #tpu.memory_space<vmem>>, %arg3: memref<8x1xf32, #tpu.memory_space<vmem>>) attributes {dimension_semantics = [#tpu.dimension_semantics<parallel>], iteration_bounds = array<i64: 1>, scalar_prefetch = 0 : i64, scratch_operands = 0 : i64, tpu.core_type = #tpu.core_type<tc>, window_params = [{transform_indices = @transform_0, window_bounds = array<i64: 8, 32>}, {transform_indices = @transform_1, window_bounds = array<i64: 8, 1>}, {transform_indices = @transform_2, window_bounds = array<i64: 8, 1>}]} {
    %c0 = arith.constant 0 : index
    %c0_0 = arith.constant 0 : index
    %0 = vector.load %arg1[%c0, %c0_0] : memref<8x32xf32, #tpu.memory_space<vmem>>, vector<8x32xf32>
    %cst = arith.constant dense<0xFF800000> : vector<8xf32>
    %1 = vector.multi_reduction <maximumf>, %0, %cst [1] : vector<8x32xf32> to vector<8xf32>
    %2 = vector.shape_cast %1 : vector<8xf32> to vector<8x1xf32>
    %3 = vector.broadcast %2 : vector<8x1xf32> to vector<8x32xf32>
    %4 = arith.subf %0, %3 : vector<8x32xf32>
    %5 = math.exp %4 : vector<8x32xf32>
    %cst_1 = arith.constant dense<0.000000e+00> : vector<8xf32>
    %6 = vector.multi_reduction <add>, %5, %cst_1 [1] : vector<8x32xf32> to vector<8xf32>
    %7 = vector.shape_cast %6 : vector<8xf32> to vector<8x1xf32>
    %8 = math.log %7 : vector<8x1xf32>
    %c0_2 = arith.constant 0 : index
    %c0_3 = arith.constant 0 : index
    %9 = vector.load %arg2[%c0_2, %c0_3] : memref<8x1xi32, #tpu.memory_space<vmem>>, vector<8x1xi32>
    %10 = tpu.iota {dimensions = array<i32: 1>} : vector<8x32xi32>
    %11 = vector.broadcast %9 : vector<8x1xi32> to vector<8x32xi32>
    %12 = arith.cmpi eq, %10, %11 : vector<8x32xi32>
    %cst_4 = arith.constant 0.000000e+00 : f32
    %13 = vector.broadcast %cst_4 : f32 to vector<8x32xf32>
    %14 = arith.select %12, %4, %13 : vector<8x32xi1>, vector<8x32xf32>
    %cst_5 = arith.constant dense<0.000000e+00> : vector<8xf32>
    %15 = vector.multi_reduction <add>, %14, %cst_5 [1] : vector<8x32xf32> to vector<8xf32>
    %16 = vector.shape_cast %15 : vector<8xf32> to vector<8x1xf32>
    %cst_6 = arith.constant dense<0.000000e+00> : vector<8xf32>
    %17 = vector.multi_reduction <add>, %4, %cst_6 [1] : vector<8x32xf32> to vector<8xf32>
    %18 = vector.shape_cast %17 : vector<8xf32> to vector<8x1xf32>
    %19 = arith.subf %8, %16 : vector<8x1xf32>
    %cst_7 = arith.constant 0.899999976 : f32
    %20 = vector.broadcast %cst_7 : f32 to vector<8x1xf32>
    %21 = arith.mulf %20, %19 : vector<8x1xf32>
    %cst_8 = arith.constant 3.125000e-02 : f32
    %22 = vector.broadcast %cst_8 : f32 to vector<8x1xf32>
    %23 = arith.mulf %18, %22 : vector<8x1xf32>
    %24 = arith.subf %8, %23 : vector<8x1xf32>
    %cst_9 = arith.constant 1.000000e-01 : f32
    %25 = vector.broadcast %cst_9 : f32 to vector<8x1xf32>
    %26 = arith.mulf %25, %24 : vector<8x1xf32>
    %27 = arith.addf %21, %26 : vector<8x1xf32>
    %c8_i32 = arith.constant 8 : i32
    %28 = arith.muli %arg0, %c8_i32 : i32
    %29 = tpu.iota {dimensions = array<i32: 0>} : vector<8x1xi32>
    %30 = vector.broadcast %28 : i32 to vector<8x1xi32>
    %31 = arith.addi %30, %29 : vector<8x1xi32>
    %c8_i32_10 = arith.constant 8 : i32
    %32 = vector.broadcast %c8_i32_10 : i32 to vector<8x1xi32>
    %33 = arith.cmpi slt, %31, %32 : vector<8x1xi32>
    %cst_11 = arith.constant 0.000000e+00 : f32
    %34 = vector.broadcast %cst_11 : f32 to vector<8x1xf32>
    %35 = arith.select %33, %27, %34 : vector<8x1xi1>, vector<8x1xf32>
    %c0_12 = arith.constant 0 : index
    %c0_13 = arith.constant 0 : index
    %36 = vector.load %arg3[%c0_12, %c0_13] : memref<8x1xf32, #tpu.memory_space<vmem>>, vector<8x1xf32>
    tpu.vector_store %arg3[%c0_12, %c0_13], %35 {strides = array<i32>} : memref<8x1xf32, #tpu.memory_space<vmem>>, vector<8x1xf32>,
    return
  }
  func.func @transform_0(%arg0: i32) -> (i32, i32) {
    %c0_i32 = arith.constant 0 : i32
    %c0_i32_0 = arith.constant 0 : i32
    return %arg0, %c0_i32 : i32, i32
  }
  func.func @transform_1(%arg0: i32) -> (i32, i32) {
    %c0_i32 = arith.constant 0 : i32
    %c0_i32_0 = arith.constant 0 : i32
    return %arg0, %c0_i32 : i32, i32
  }
  func.func @transform_2(%arg0: i32) -> (i32, i32) {
    %c0_i32 = arith.constant 0 : i32
    %c0_i32_0 = arith.constant 0 : i32
    return %arg0, %c0_i32 : i32, i32
  }
}

</mosaic_0001>

<llo_original>
// kernel: tpu_custom_call.1
$region0: #{tpu_custom_call.1}
  #allocation0 [shape = 'u32[]', space=smem, size = 0x4, offset = 0x4, fixed_abs, tag = 'smem constant byte address 0x4 - core index']
  #allocation1 [shape = 'u32[144,128]{1,0:T(1,128)}', space=vmem, size = 0x12000, scoped, tag = 'internal scratch']
  %s0 = inlined_call_operand.vmem [shape: f32[8,32], index: 0, kind: input, shape index: {}]
  %s1 = inlined_call_operand.vmem [shape: s32[8,1], index: 1, kind: input, shape index: {}]
  %s2 = inlined_call_operand.vmem [shape: f32[8,1], index: 2, kind: output, shape index: {}]
  %s3 = sld [smem:[#allocation0]]
  $region18: #{tpu_custom_call.1} parent=0
    _
  %s5 = ssub.s32 1, %s3
  %s6 = scalar_select 0, %s5, %s3
  // Predicated region
  $region2: #{tpu_custom_call.1} parent=0 // pred_check
    _
  $region3: #{tpu_custom_call.1} parent=0 // pred_check_branch
    %8 = sbr.rel (0) target = $region5
  $region4: #{tpu_custom_call.1} parent=0 // pred_region
    _
  $region5: #{tpu_custom_call.1} parent=0 // pred_fallthru
    _
  // Predicated region
  $region6: #{tpu_custom_call.1} parent=0 // pred_check
    _
  $region7: #{tpu_custom_call.1} parent=0 // pred_check_branch
    %10 = sbr.rel (0) target = $region9
  $region8: #{tpu_custom_call.1} parent=0 // pred_region
    _
  $region9: #{tpu_custom_call.1} parent=0 // pred_fallthru
    _
  %v11 = vld [vmem:[%s0] sm:$0xff]
  %vm12 = vcmask 261120
  %v13 = vsel %vm12, %v11, -inf
  %14 = vmax.xlane.f32.xlu0 %v13
  %v15 = vpop.xlane.xlu0 %14
  %v16 = vsub.f32 %v11, %v15
  %v17 = vmul.f32 %v16, 1.442695
  %v18 = vpow.pop %v17
  %v19 = vsel %vm12, %v18, 0.0
  %20 = vadd.xlane.f32.xlu0 %v19
  %v21 = vpop.xlane.xlu0 %20
  %v22 = vlog2.pop %v21
  %v23 = vmul.f32 %v22, 0.6931472
  %v24 = vld [vmem:[%s1] sm:$0xff]
  %v25 = vlaneseq
  %v26 = vand.u32 %v25, 127
  %27 = vset.pattern.permute.xlu0 0
  %28 = vperm.xlu0 %27, %v24
  %v29 = vpop.permute.xlu0 %28
  %vm30 = vcmp.eq.s32.totalorder %v26, %v29
  %v31 = vsel %vm30, %v16, 0.0
  %v32 = vsel %vm12, %v31, 0.0
  %33 = vadd.xlane.f32.xlu0 %v32
  %v34 = vpop.xlane.xlu0 %33
  %v35 = vsel %vm12, %v16, 0.0
  %36 = vadd.xlane.f32.xlu0 %v35
  %v37 = vpop.xlane.xlu0 %36
  %v38 = vsub.f32 %v23, %v34
  %v39 = vmul.f32 %v38, 0.9
  %v40 = vmul.f32 %v37, 0.03125
  %v41 = vsub.f32 %v23, %v40
  %v42 = vmul.f32 %v41, 0.1
  %v43 = vadd.f32 %v39, %v42
  %s44 = smul.u32 0, 8
  %v45 = vlaneseq
  %v46 = vshrl.u32 %v45, 7
  %v47 = vstv %s44
  %v48 = vadd.s32 %v47, %v46
  %vm49 = vcmp.lt.s32.totalorder %v48, 8
  %v50 = vsel %vm49, %v43, 0.0
  %vm51 = vcmask 7168
  %52 = vst.msk [vmem:[%s2] sm:$0xff] %vm51, %v50
  // Predicated region
  $region10: #{tpu_custom_call.1} parent=0 // pred_check
    _
  $region11: #{tpu_custom_call.1} parent=0 // pred_check_branch
    %54 = sbr.rel (0) target = $region13
  $region12: #{tpu_custom_call.1} parent=0 // pred_region
    _
  $region13: #{tpu_custom_call.1} parent=0 // pred_fallthru
    _
  // Predicated region
  $region14: #{tpu_custom_call.1} parent=0 // pred_check
    _
  $region15: #{tpu_custom_call.1} parent=0 // pred_check_branch
    %56 = sbr.rel (0) target = $region17
  $region16: #{tpu_custom_call.1} parent=0 // pred_region
    _
  $region17: #{tpu_custom_call.1} parent=0 // pred_fallthru
    _

</llo_original>
